<compile_context>
chip_gen: v5e
topology: v5e:2x2
jax: 0.10.0
libtpu: 0.0.40
codegen_flags: <defaults>
</compile_context>

<pallas_src>
import jax
import jax.numpy as jnp
from jax import lax
from jax.experimental import pallas as pl
from jax.experimental.pallas import tpu as pltpu


# ----------------------------------------------------------------------------
# Kernel
# ----------------------------------------------------------------------------
def _linear_nobias_kernel(x_ref, w_ref, o_ref):
    """x: (TM, K), w: (N, K) [PyTorch Linear layout], o: (TM, N)."""
    acc = lax.dot_general(
        x_ref[...], w_ref[...],
        dimension_numbers=(((1,), (1,)), ((), ())),   # contract over K
        preferred_element_type=jnp.float32)
    o_ref[...] = acc.astype(o_ref.dtype)


# ----------------------------------------------------------------------------
# Wrapper
# ----------------------------------------------------------------------------
def linear_svm_forward(x, w, *, tile_m=512):
    """LinearSVM.forward: x (M, K) @ w (N, K).T -> (M, N), no bias.

    The weight is passed in PyTorch's (out_dim, in_dim) layout and contracted
    in-kernel, so no host-side transpose / padding copies are materialized.
    """
    M, K = x.shape
    N, K2 = w.shape
    assert K == K2, (x.shape, w.shape)

    # Cap the M tile so double-buffered x tiles stay well under VMEM budgets
    # (sized for v7x's 64 MiB physical / 32 MiB default scoped limit).
    bytes_per_row = K * jnp.dtype(x.dtype).itemsize
    vmem_budget = 8 * 1024 * 1024          # per-input, double-buffered
    max_rows = max(8, vmem_budget // max(1, 2 * bytes_per_row))
    tile_m = min(tile_m, (max_rows // 8) * 8)

    if M <= tile_m:
        tm = M                              # full-array block: always legal
    else:
        tm = tile_m                         # multiple of 8; last tile partial

    grid = (pl.cdiv(M, tm),)
    return pl.pallas_call(
        _linear_nobias_kernel,
        out_shape=jax.ShapeDtypeStruct((M, N), x.dtype),
        grid=grid,
        in_specs=[
            pl.BlockSpec((tm, K), lambda i: (i, 0)),   # x: tiled over M
            pl.BlockSpec((N, K), lambda i: (0, 0)),    # w: VMEM-resident
        ],
        out_specs=pl.BlockSpec((tm, N), lambda i: (i, 0)),
        compiler_params=pltpu.CompilerParams(
            dimension_semantics=("parallel",)),        # megacore on v7x
    )(x, w)


# ----------------------------------------------------------------------------
# Self-test
# ----------------------------------------------------------------------------
if __name__ == "__main__":
    key = jax.random.PRNGKey(0)
    kx, kw, kx2 = jax.random.split(key, 3)

    # Small shapes implied by the module: x (batch, in_dim), out_dim=1 default.
    in_dim, out_dim, batch = 32, 1, 8
    x = jax.random.normal(kx, (batch, in_dim), jnp.float32)
    w = 0.1 * jax.random.normal(kw, (out_dim, in_dim), jnp.float32)

    h = jax.block_until_ready(linear_svm_forward(x, w))
    assert h.shape == (batch, out_dim), h.shape
    ref = x @ w.T
    assert jnp.allclose(h, ref, atol=1e-5, rtol=1e-5), "small-batch mismatch"

    # Exercise the tiled path (multiple M tiles + masked partial last tile).
    x2 = jax.random.normal(kx2, (1037, in_dim), jnp.float32)
    h2 = jax.block_until_ready(linear_svm_forward(x2, w, tile_m=512))
    assert jnp.allclose(h2, x2 @ w.T, atol=1e-5, rtol=1e-5), "tiled mismatch"

    print("KERNEL_OK")
</pallas_src>

<mosaic_0001>
module attributes {stable_mosaic.version = 11 : i64} {
  func.func @_linear_nobias_kernel(%arg0: i32, %arg1: memref<8x32xf32, #tpu.memory_space<vmem>>, %arg2: memref<1x32xf32, #tpu.memory_space<vmem>>, %arg3: memref<8x1xf32, #tpu.memory_space<vmem>>) attributes {dimension_semantics = [#tpu.dimension_semantics<parallel>], iteration_bounds = array<i64: 1>, scalar_prefetch = 0 : i64, scratch_operands = 0 : i64, tpu.core_type = #tpu.core_type<tc>, window_params = [{transform_indices = @transform_0, window_bounds = array<i64: 8, 32>}, {pipeline_mode = #tpu.pipeline_mode<synchronous>, transform_indices = @transform_1, window_bounds = array<i64: 1, 32>}, {transform_indices = @transform_2, window_bounds = array<i64: 8, 1>}]} {
    %c0 = arith.constant 0 : index
    %c0_0 = arith.constant 0 : index
    %0 = vector.load %arg1[%c0, %c0_0] : memref<8x32xf32, #tpu.memory_space<vmem>>, vector<8x32xf32>
    %c0_1 = arith.constant 0 : index
    %c0_2 = arith.constant 0 : index
    %1 = vector.load %arg2[%c0_1, %c0_2] : memref<1x32xf32, #tpu.memory_space<vmem>>, vector<1x32xf32>
    %cst = arith.constant dense<0.000000e+00> : vector<8x1xf32>
    %2 = tpu.matmul %0, %1, %cst {dimension_numbers = #tpu.dot_dimension_numbers<[1], [1], [0], [0], [0, 0, 1, 0], [], []>} : vector<8x32xf32>, vector<1x32xf32>, vector<8x1xf32> -> vector<8x1xf32>
    %c0_3 = arith.constant 0 : index
    %c0_4 = arith.constant 0 : index
    %3 = vector.load %arg3[%c0_3, %c0_4] : memref<8x1xf32, #tpu.memory_space<vmem>>, vector<8x1xf32>
    tpu.vector_store %arg3[%c0_3, %c0_4], %2 {strides = array<i32>} : memref<8x1xf32, #tpu.memory_space<vmem>>, vector<8x1xf32>,
    return
  }
  func.func @transform_0(%arg0: i32) -> (i32, i32) {
    %c0_i32 = arith.constant 0 : i32
    %c0_i32_0 = arith.constant 0 : i32
    return %arg0, %c0_i32 : i32, i32
  }
  func.func @transform_1(%arg0: i32) -> (i32, i32) {
    %c0_i32 = arith.constant 0 : i32
    %c0_i32_0 = arith.constant 0 : i32
    %c0_i32_1 = arith.constant 0 : i32
    return %c0_i32, %c0_i32_0 : i32, i32
  }
  func.func @transform_2(%arg0: i32) -> (i32, i32) {
    %c0_i32 = arith.constant 0 : i32
    %c0_i32_0 = arith.constant 0 : i32
    return %arg0, %c0_i32 : i32, i32
  }
}

</mosaic_0001>

<llo_original>
// kernel: tpu_custom_call.1
$region0: #{tpu_custom_call.1}
  #allocation0 [shape = 'u32[]', space=smem, size = 0x4, offset = 0x4, fixed_abs, tag = 'smem constant byte address 0x4 - core index']
  #allocation1 [shape = 'u32[72,128]{1,0:T(1,128)}', space=vmem, size = 0x9000, scoped, tag = 'internal scratch']
  %s0 = inlined_call_operand.hbm [shape: f32[8,32], index: 0, kind: input, shape index: {}]
  %s1 = inlined_call_operand.hbm [shape: f32[1,32], index: 1, kind: input, shape index: {}]
  %s2 = inlined_call_operand.vmem [shape: f32[8,1], index: 2, kind: output, shape index: {}]
  %s3 = sld [smem:[#allocation0]]
  $region26: #{tpu_custom_call.1} parent=0
    _
  %s5 = ssub.s32 1, %s3
  %s6 = scalar_select 0, %s5, %s3
  $region1: #{tpu_custom_call.1} parent=0
    #allocation2 [shape = 'u8[4096]{0}', space=vmem, size = 0x1000, scoped, tag = 'input window, operand 0, single buffered']
    #allocation3 [shape = 's32[1]{0}', space=sflag, size = 0x4, scoped, tag = 'scoped memory for tpu_custom_call.1']
    #allocation4 [shape = 'u8[512]{0}', space=vmem, size = 0x400, scoped, tag = 'input window, operand 1, single buffered']
    #allocation5 [shape = 's32[1]{0}', space=sflag, size = 0x4, scoped, tag = 'scoped memory for tpu_custom_call.1']
    %7 = vsyncpa [#allocation3], 0
    %8 = vsyncpa [#allocation5], 0
    // Predicated region
    $region2: #{tpu_custom_call.1} parent=1 // pred_check
      _
    $region3: #{tpu_custom_call.1} parent=1 // pred_check_branch
      %10 = sbr.rel (0) target = $region5
    $region4: #{tpu_custom_call.1} parent=1 // pred_region
      %12 = vsyncadd [#allocation3], 0
      %s14 = sshll.u32 %s0, 4
      %s15 = int_to_ptr.hbm [resolvable:$true] %s14
      %s16 = sshll.u32 [#allocation2], 4
      %s17 = int_to_ptr.vmem [resolvable:$true] %s16
      %19 = dma.hbm_to_vmem [thread:$0]  %s15, 128, %s17, [#allocation3]
    $region5: #{tpu_custom_call.1} parent=1 // pred_fallthru
      _
    // Predicated region
    $region6: #{tpu_custom_call.1} parent=1 // pred_check
      _
    $region7: #{tpu_custom_call.1} parent=1 // pred_check_branch
      %21 = sbr.rel (0) target = $region9
    $region8: #{tpu_custom_call.1} parent=1 // pred_region
      %23 = vsyncadd [#allocation5], 0
      %s25 = sshll.u32 %s1, 4
      %s26 = int_to_ptr.hbm [resolvable:$true] %s25
      %s27 = sshll.u32 [#allocation4], 4
      %s28 = int_to_ptr.vmem [resolvable:$true] %s27
      %30 = dma.hbm_to_vmem [thread:$0]  %s26, 16, %s28, [#allocation5]
    $region9: #{tpu_custom_call.1} parent=1 // pred_fallthru
      _
    // Predicated region
    $region10: #{tpu_custom_call.1} parent=1 // pred_check
      _
    $region11: #{tpu_custom_call.1} parent=1 // pred_check_branch
      %32 = sbr.rel (0) target = $region13
    $region12: #{tpu_custom_call.1} parent=1 // pred_region
      %34 = dma.done [#allocation3], 128
    $region13: #{tpu_custom_call.1} parent=1 // pred_fallthru
      _
    // Predicated region
    $region14: #{tpu_custom_call.1} parent=1 // pred_check
      _
    $region15: #{tpu_custom_call.1} parent=1 // pred_check_branch
      %36 = sbr.rel (0) target = $region17
    $region16: #{tpu_custom_call.1} parent=1 // pred_region
      %38 = dma.done [#allocation5], 16
    $region17: #{tpu_custom_call.1} parent=1 // pred_fallthru
      _
    %v39 = vld [vmem:[#allocation2] sm:$0xff]
    %v40 = vld [vmem:[#allocation4] sm:$0x1]
    %v42 = vperm.slane %v40, 0
    %v44 = vmul.f32 %v39, %v42
    %vm45 = vcmask 261120
    %v46 = vsel %vm45, %v44, 0.0
    %47 = vadd.xlane.f32.xlu0 %v46
    %v48 = vpop.xlane.xlu0 %47
    %vm49 = vcmask 7168
    %50 = vst.msk [vmem:[%s2] sm:$0xff] %vm49, %v48
    // Predicated region
    $region18: #{tpu_custom_call.1} parent=1 // pred_check
      _
    $region19: #{tpu_custom_call.1} parent=1 // pred_check_branch
      %52 = sbr.rel (0) target = $region21
    $region20: #{tpu_custom_call.1} parent=1 // pred_region
      _
    $region21: #{tpu_custom_call.1} parent=1 // pred_fallthru
      _
    // Predicated region
    $region22: #{tpu_custom_call.1} parent=1 // pred_check
      _
    $region23: #{tpu_custom_call.1} parent=1 // pred_check_branch
      %54 = sbr.rel (0) target = $region25
    $region24: #{tpu_custom_call.1} parent=1 // pred_region
      _
    $region25: #{tpu_custom_call.1} parent=1 // pred_fallthru
      _
    %55 = vsyncpa [#allocation3], 1
    %56 = vsyncpa [#allocation5], 1

</llo_original>
